<compile_context>
chip_gen: v6e
topology: v6e:2x2x1
jax: 0.10.0
libtpu: 0.0.40
codegen_flags: <defaults>
</compile_context>

<pallas_src>
import jax
import jax.numpy as jnp
from jax.experimental import pallas as pl
from jax.experimental.pallas import tpu as pltpu

LANE = 128
SUBLANE = 8


def _round_up(x, m):
    return ((x + m - 1) // m) * m


def _pick_tile(dim_p, target):
    """Largest multiple of 128 <= target that divides dim_p (dim_p % 128 == 0)."""
    t = max(LANE, min((target // LANE) * LANE, dim_p))
    while dim_p % t:
        t -= LANE
    return t


def _vmem_limit_bytes():
    """~75% of physical per-core VMEM (generation aware), conservatively clamped."""
    try:
        cap = pltpu.get_tpu_info().vmem_capacity_bytes
    except Exception:
        cap = 64 * 1024 * 1024  # conservative fallback (v7x per-core size)
    return int(min(max(cap * 3 // 4, 32 * 1024 * 1024), 112 * 1024 * 1024))


def feedforward_kernel(x_ref, w1_ref, b1_ref, w2_ref, b2_ref, o_ref, acc_ref):
    k = pl.program_id(2)

    @pl.when(k == 0)
    def _init():
        acc_ref[...] = jnp.zeros_like(acc_ref)

    # Hidden chunk: bf16 MXU matmul with f32 accumulation; bias + ReLU in f32.
    h = jnp.dot(x_ref[...], w1_ref[...], preferred_element_type=jnp.float32)
    h = jnp.maximum(h + b1_ref[...], 0.0)

    # Output partial product for this hidden chunk, accumulated in f32 VMEM.
    acc_ref[...] += jnp.dot(h.astype(w2_ref.dtype), w2_ref[...],
                            preferred_element_type=jnp.float32)

    @pl.when(k == pl.num_programs(2) - 1)
    def _store():
        o_ref[...] = (acc_ref[...] + b2_ref[...]).astype(o_ref.dtype)


def prepare_ffn_params(w1, b1, w2, b2, *, compute_dtype=jnp.bfloat16,
                       th_target=512, tn_target=512):
    """Pad + cast the (static) weights once.  w1:(In,H), b1:(1,H)/(H,),
    w2:(H,Out), b2:(1,Out)/(Out,)."""
    In, H = w1.shape
    Out = w2.shape[1]
    In_p = _round_up(In, LANE)
    H_p = _round_up(H, LANE)
    Out_p = _round_up(Out, LANE)
    # 256-aligned tiles preferred on v6e/v7x (2x256x256 MXU); falls back to 128.
    th = _pick_tile(H_p, th_target)
    tn = _pick_tile(Out_p, tn_target)

    w1p = jnp.pad(w1, ((0, In_p - In), (0, H_p - H))).astype(compute_dtype)
    w2p = jnp.pad(w2, ((0, H_p - H), (0, Out_p - Out))).astype(compute_dtype)
    b1p = jnp.pad(b1.reshape(1, -1), ((0, 0), (0, H_p - H))).astype(jnp.float32)
    b2p = jnp.pad(b2.reshape(1, -1), ((0, 0), (0, Out_p - Out))).astype(jnp.float32)

    return dict(w1=w1p, b1=b1p, w2=w2p, b2=b2p,
                dims=(In, H, Out), padded=(In_p, H_p, Out_p),
                tiles=(th, tn), compute_dtype=compute_dtype)


def feedforward(x, params, *, block_rows=256):
    """x:(B, In) -> (B, Out), using pre-padded params from prepare_ffn_params."""
    In, H, Out = params["dims"]
    In_p, H_p, Out_p = params["padded"]
    th, tn = params["tiles"]
    cdt = params["compute_dtype"]
    cdt_bytes = jnp.dtype(cdt).itemsize

    B = x.shape[0]
    assert x.shape[1] == In

    vmem_limit = _vmem_limit_bytes()

    # Batch tile: multiple of 8 sublanes, adaptively sized (small padding waste),
    # shrunk if the VMEM footprint would exceed the budget.
    tm = _round_up(min(block_rows, B), SUBLANE)

    def footprint(tm_):
        return (2 * tm_ * In_p * cdt_bytes      # x tile, double buffered
                + 2 * In_p * th * cdt_bytes     # w1 tile
                + 2 * th * 4                    # b1 tile
                + 2 * th * tn * cdt_bytes       # w2 tile
                + 2 * tn * 4                    # b2 tile
                + 2 * tm_ * tn * 4              # out tile (f32-width bound)
                + tm_ * tn * 4                  # f32 accumulator scratch
                + tm_ * th * 4)                 # live f32 hidden chunk

    while tm > SUBLANE and footprint(tm) > vmem_limit:
        tm = _round_up(tm // 2, SUBLANE)
    assert footprint(tm) <= vmem_limit, "FFN tiles do not fit in VMEM budget"

    B_p = _round_up(B, tm)

    # Only the activation is padded per call, and only when actually needed.
    # TODO(synk): for production, require In % 128 == 0 so xp never hits HBM twice.
    xp = x
    if (B_p, In_p) != (B, In):
        xp = jnp.pad(x, ((0, B_p - B), (0, In_p - In)))
    xp = xp.astype(cdt)

    gm, gn, gk = B_p // tm, Out_p // tn, H_p // th
    grid = (gm, gn, gk)

    flops = 2 * B_p * In_p * H_p + 2 * B_p * H_p * Out_p
    bytes_accessed = (cdt_bytes * (B_p * In_p + gm * In_p * H_p + gm * H_p * Out_p)
                      + 4 * (H_p + Out_p)
                      + jnp.dtype(x.dtype).itemsize * B_p * Out_p)

    out_p = pl.pallas_call(
        feedforward_kernel,
        out_shape=jax.ShapeDtypeStruct((B_p, Out_p), x.dtype),
        grid_spec=pltpu.PrefetchScalarGridSpec(
            num_scalar_prefetch=0,
            grid=grid,
            in_specs=[
                # x: one batch tile, full (padded) In per step.
                pl.BlockSpec((tm, In_p), lambda i, j, k: (i, 0)),
                # W1 chunk over the hidden dim.
                pl.BlockSpec((In_p, th), lambda i, j, k: (0, k)),
                pl.BlockSpec((1, th), lambda i, j, k: (0, k)),
                # W2 chunk: hidden chunk x output tile.
                pl.BlockSpec((th, tn), lambda i, j, k: (k, j)),
                pl.BlockSpec((1, tn), lambda i, j, k: (0, j)),
            ],
            # Same output block across the reduction axis -> VMEM-resident acc.
            out_specs=pl.BlockSpec((tm, tn), lambda i, j, k: (i, j)),
            scratch_shapes=[pltpu.VMEM((tm, tn), jnp.float32)],
        ),
        compiler_params=pltpu.CompilerParams(
            # M and N tiles are independent -> both shard across v7x TCs;
            # the hidden reduction axis is last and "arbitrary".
            dimension_semantics=("parallel", "parallel", "arbitrary"),
            vmem_limit_bytes=vmem_limit,
        ),
        cost_estimate=pl.CostEstimate(
            flops=flops, transcendentals=0, bytes_accessed=int(bytes_accessed)
        ),
    )(xp, params["w1"], params["b1"], params["w2"], params["b2"])

    return out_p[:B, :Out]


if __name__ == "__main__":
    # Small shapes consistent with the module; chosen (with small tile targets)
    # so all three grid axes are exercised: 3 batch tiles x 2 output tiles x
    # 2 hidden chunks, including the accumulate-across-H path and padded tails.
    batch = 20
    input_neurons = 16
    hidden_neurons = 160
    output_neurons = 136

    key = jax.random.PRNGKey(0)
    kx, kw1, kb1, kw2, kb2 = jax.random.split(key, 5)

    x = jax.random.normal(kx, (batch, input_neurons), dtype=jnp.float32)

    # PyTorch-style init: U(-1/sqrt(fan_in), 1/sqrt(fan_in)).
    lim1 = 1.0 / jnp.sqrt(jnp.float32(input_neurons))
    lim2 = 1.0 / jnp.sqrt(jnp.float32(hidden_neurons))
    w1 = jax.random.uniform(kw1, (input_neurons, hidden_neurons),
                            minval=-lim1, maxval=lim1, dtype=jnp.float32)
    b1 = jax.random.uniform(kb1, (1, hidden_neurons),
                            minval=-lim1, maxval=lim1, dtype=jnp.float32)
    w2 = jax.random.uniform(kw2, (hidden_neurons, output_neurons),
                            minval=-lim2, maxval=lim2, dtype=jnp.float32)
    b2 = jax.random.uniform(kb2, (1, output_neurons),
                            minval=-lim2, maxval=lim2, dtype=jnp.float32)

    # Weights are padded / cast to bf16 exactly once.
    params = prepare_ffn_params(w1, b1, w2, b2, compute_dtype=jnp.bfloat16,
                                th_target=128, tn_target=128)

    out = feedforward(x, params, block_rows=8)
    jax.block_until_ready(out)

    # Pure-JAX f32 reference; tolerance loosened for bf16 MXU inputs.
    ref = jnp.maximum(x @ w1 + b1, 0.0) @ w2 + b2
    assert out.shape == (batch, output_neurons)
    assert jnp.allclose(out, ref, atol=3e-2, rtol=3e-2), (
        float(jnp.max(jnp.abs(out - ref))))

    print("KERNEL_OK")
</pallas_src>

<mosaic_0001>
module attributes {stable_mosaic.version = 11 : i64} {
  func.func @feedforward_kernel(%arg0: i32, %arg1: i32, %arg2: i32, %arg3: memref<8x128xbf16, #tpu.memory_space<vmem>>, %arg4: memref<128x128xbf16, #tpu.memory_space<vmem>>, %arg5: memref<1x128xf32, #tpu.memory_space<vmem>>, %arg6: memref<128x128xbf16, #tpu.memory_space<vmem>>, %arg7: memref<1x128xf32, #tpu.memory_space<vmem>>, %arg8: memref<8x128xf32, #tpu.memory_space<vmem>>, %arg9: memref<8x128xf32, #tpu.memory_space<vmem>>) attributes {dimension_semantics = [#tpu.dimension_semantics<parallel>, #tpu.dimension_semantics<parallel>, #tpu.dimension_semantics<arbitrary>], iteration_bounds = array<i64: 3, 2, 2>, scalar_prefetch = 0 : i64, scratch_operands = 1 : i64, tpu.core_type = #tpu.core_type<tc>, window_params = [{transform_indices = @transform_0, window_bounds = array<i64: 8, 128>}, {transform_indices = @transform_1, window_bounds = array<i64: 128, 128>}, {transform_indices = @transform_2, window_bounds = array<i64: 1, 128>}, {transform_indices = @transform_3, window_bounds = array<i64: 128, 128>}, {transform_indices = @transform_4, window_bounds = array<i64: 1, 128>}, {transform_indices = @transform_5, window_bounds = array<i64: 8, 128>}]} {
    %c0_i32 = arith.constant 0 : i32
    %0 = arith.cmpi eq, %arg2, %c0_i32 : i32
    %1 = arith.extui %0 : i1 to i32
    %c0_i32_0 = arith.constant 0 : i32
    %2 = arith.cmpi ne, %1, %c0_i32_0 : i32
    scf.if %2 {
      %cst_15 = arith.constant 0.000000e+00 : f32
      %20 = vector.broadcast %cst_15 : f32 to vector<8x128xf32>
      %c0_16 = arith.constant 0 : index
      %c0_17 = arith.constant 0 : index
      %21 = vector.load %arg9[%c0_16, %c0_17] : memref<8x128xf32, #tpu.memory_space<vmem>>, vector<8x128xf32>
      tpu.vector_store %arg9[%c0_16, %c0_17], %20 {strides = array<i32>} : memref<8x128xf32, #tpu.memory_space<vmem>>, vector<8x128xf32>,
    } else {
    }
    %c0 = arith.constant 0 : index
    %c0_1 = arith.constant 0 : index
    %3 = vector.load %arg3[%c0, %c0_1] : memref<8x128xbf16, #tpu.memory_space<vmem>>, vector<8x128xbf16>
    %c0_2 = arith.constant 0 : index
    %c0_3 = arith.constant 0 : index
    %4 = vector.load %arg4[%c0_2, %c0_3] : memref<128x128xbf16, #tpu.memory_space<vmem>>, vector<128x128xbf16>
    %cst = arith.constant dense<0.000000e+00> : vector<8x128xf32>
    %5 = tpu.matmul %3, %4, %cst {dimension_numbers = #tpu.dot_dimension_numbers<[1], [0], [0], [1], [0, 0, 1, 1], [], []>} : vector<8x128xbf16>, vector<128x128xbf16>, vector<8x128xf32> -> vector<8x128xf32>
    %c0_4 = arith.constant 0 : index
    %c0_5 = arith.constant 0 : index
    %6 = vector.load %arg5[%c0_4, %c0_5] : memref<1x128xf32, #tpu.memory_space<vmem>>, vector<1x128xf32>
    %7 = vector.broadcast %6 : vector<1x128xf32> to vector<8x128xf32>
    %8 = arith.addf %5, %7 : vector<8x128xf32>
    %cst_6 = arith.constant 0.000000e+00 : f32
    %9 = vector.broadcast %cst_6 : f32 to vector<8x128xf32>
    %10 = arith.maximumf %8, %9 : vector<8x128xf32>
    %c0_7 = arith.constant 0 : index
    %c0_8 = arith.constant 0 : index
    %11 = vector.load %arg9[%c0_7, %c0_8] : memref<8x128xf32, #tpu.memory_space<vmem>>, vector<8x128xf32>
    %12 = arith.truncf %10 : vector<8x128xf32> to vector<8x128xbf16>
    %c0_9 = arith.constant 0 : index
    %c0_10 = arith.constant 0 : index
    %13 = vector.load %arg6[%c0_9, %c0_10] : memref<128x128xbf16, #tpu.memory_space<vmem>>, vector<128x128xbf16>
    %cst_11 = arith.constant dense<0.000000e+00> : vector<8x128xf32>
    %14 = tpu.matmul %12, %13, %cst_11 {dimension_numbers = #tpu.dot_dimension_numbers<[1], [0], [0], [1], [0, 0, 1, 1], [], []>} : vector<8x128xbf16>, vector<128x128xbf16>, vector<8x128xf32> -> vector<8x128xf32>
    %15 = arith.addf %11, %14 : vector<8x128xf32>
    %c0_12 = arith.constant 0 : index
    %c0_13 = arith.constant 0 : index
    %16 = vector.load %arg9[%c0_12, %c0_13] : memref<8x128xf32, #tpu.memory_space<vmem>>, vector<8x128xf32>
    tpu.vector_store %arg9[%c0_12, %c0_13], %15 {strides = array<i32>} : memref<8x128xf32, #tpu.memory_space<vmem>>, vector<8x128xf32>,
    %c1_i32 = arith.constant 1 : i32
    %17 = arith.cmpi eq, %arg2, %c1_i32 : i32
    %18 = arith.extui %17 : i1 to i32
    %c0_i32_14 = arith.constant 0 : i32
    %19 = arith.cmpi ne, %18, %c0_i32_14 : i32
    scf.if %19 {
      %c0_15 = arith.constant 0 : index
      %c0_16 = arith.constant 0 : index
      %20 = vector.load %arg9[%c0_15, %c0_16] : memref<8x128xf32, #tpu.memory_space<vmem>>, vector<8x128xf32>
      %c0_17 = arith.constant 0 : index
      %c0_18 = arith.constant 0 : index
      %21 = vector.load %arg7[%c0_17, %c0_18] : memref<1x128xf32, #tpu.memory_space<vmem>>, vector<1x128xf32>
      %22 = vector.broadcast %21 : vector<1x128xf32> to vector<8x128xf32>
      %23 = arith.addf %20, %22 : vector<8x128xf32>
      %c0_19 = arith.constant 0 : index
      %c0_20 = arith.constant 0 : index
      %24 = vector.load %arg8[%c0_19, %c0_20] : memref<8x128xf32, #tpu.memory_space<vmem>>, vector<8x128xf32>
      tpu.vector_store %arg8[%c0_19, %c0_20], %23 {strides = array<i32>} : memref<8x128xf32, #tpu.memory_space<vmem>>, vector<8x128xf32>,
    } else {
    }
    return
  }
  func.func @transform_0(%arg0: i32, %arg1: i32, %arg2: i32) -> (i32, i32) {
    %c0_i32 = arith.constant 0 : i32
    %c0_i32_0 = arith.constant 0 : i32
    return %arg0, %c0_i32 : i32, i32
  }
  func.func @transform_1(%arg0: i32, %arg1: i32, %arg2: i32) -> (i32, i32) {
    %c0_i32 = arith.constant 0 : i32
    %c0_i32_0 = arith.constant 0 : i32
    return %c0_i32, %arg2 : i32, i32
  }
  func.func @transform_2(%arg0: i32, %arg1: i32, %arg2: i32) -> (i32, i32) {
    %c0_i32 = arith.constant 0 : i32
    %c0_i32_0 = arith.constant 0 : i32
    return %c0_i32, %arg2 : i32, i32
  }
  func.func @transform_3(%arg0: i32, %arg1: i32, %arg2: i32) -> (i32, i32) {
    %c0_i32 = arith.constant 0 : i32
    return %arg2, %arg1 : i32, i32
  }
  func.func @transform_4(%arg0: i32, %arg1: i32, %arg2: i32) -> (i32, i32) {
    %c0_i32 = arith.constant 0 : i32
    %c0_i32_0 = arith.constant 0 : i32
    return %c0_i32, %arg1 : i32, i32
  }
  func.func @transform_5(%arg0: i32, %arg1: i32, %arg2: i32) -> (i32, i32) {
    %c0_i32 = arith.constant 0 : i32
    return %arg0, %arg1 : i32, i32
  }
}

</mosaic_0001>

<llo_original>
// kernel: tpu_custom_call.1
$region0: #{tpu_custom_call.1}
  #allocation0 [shape = 'u32[]', space=smem, size = 0x4, offset = 0x4, fixed_abs, tag = 'smem constant byte address 0x4 - core index']
  #allocation1 [shape = 'u32[144,128]{1,0:T(1,128)}', space=vmem, size = 0x12000, scoped, tag = 'internal scratch']
  #allocation2 [shape = 'f32[8,128]{1,0:T(8,128)}', space=vmem, size = 0x1000, scoped, tag = 'scratch operand']
  %s0 = inlined_call_operand.hbm [shape: bf16[24,128], index: 0, kind: input, shape index: {}]
  %s1 = inlined_call_operand.hbm [shape: bf16[128,256], index: 1, kind: input, shape index: {}]
  %s2 = inlined_call_operand.vmem [shape: f32[1,256], index: 2, kind: input, shape index: {}]
  %s3 = inlined_call_operand.hbm [shape: bf16[256,256], index: 3, kind: input, shape index: {}]
  %s4 = inlined_call_operand.vmem [shape: f32[1,256], index: 4, kind: input, shape index: {}]
  %s5 = inlined_call_operand.hbm [shape: f32[24,256], index: 5, kind: output, shape index: {}]
  %s6 = sld [smem:[#allocation0]]
  $region73: #{tpu_custom_call.1} parent=0
    _
  %s8 = ssub.s32 1, %s6
  %s9 = scalar_select 0, %s8, %s6
  $region1: #{tpu_custom_call.1} parent=0
    #allocation3 [shape = 'u8[4096]{0}', space=vmem, size = 0x1000, scoped, tag = 'input window, operand 0']
    #allocation4 [shape = 's32[2]{0}', space=sflag, size = 0x8, scoped, tag = 'scoped memory for tpu_custom_call.1']
    #allocation5 [shape = 's32[2]{0}', space=sflag, size = 0x8, scoped, tag = 'scoped memory for tpu_custom_call.1']
    #allocation6 [shape = 'u8[65536]{0}', space=vmem, size = 0x10000, scoped, tag = 'input window, operand 1']
    #allocation7 [shape = 's32[2]{0}', space=sflag, size = 0x8, scoped, tag = 'scoped memory for tpu_custom_call.1']
    #allocation8 [shape = 'u8[65536]{0}', space=vmem, size = 0x10000, scoped, tag = 'input window, operand 3']
    #allocation9 [shape = 'u8[8192]{0}', space=vmem, size = 0x2000, scoped, tag = 'output window, operand 0']
    %10 = vsyncpa [#allocation4], 0
    %s11 = scalar_lea.sflag [#allocation4], 1
    %12 = vsyncpa %s11, 0
    %13 = vsyncpa [#allocation7], 0
    %s14 = scalar_lea.sflag [#allocation7], 1
    %15 = vsyncpa %s14, 0
    %16 = vsyncpa [#allocation5], 0
    %s17 = scalar_lea.sflag [#allocation5], 1
    %18 = vsyncpa %s17, 0
    loop: start=0, step=1, limit=14
    $region2: #{tpu_custom_call.1} parent=1 // loop_pre_header
      _
    $region3: #{tpu_custom_call.1} parent=1 // loop_header
      %s20 = sphi 0, %s24
      %p21 = scmp.ge.s32.totalorder %s20, 14
      %s27 = sphi 0, %s46
      %s28 = sphi 0, %s42
      %s29 = sphi 0, %s38
      %s30 = sphi 0, %s27
      %s31 = sphi 0, %s28
      %s32 = sphi 0, %s29
      %s33 = sphi 0, %s30
      %s34 = sphi 0, %s31
      %s35 = sphi 0, %s32
      %s49 = sphi 0, %s51
      %s52 = sphi 0, %s49
      %s53 = sphi 0, %s52
      %s69 = sphi 0, %s53
      %s75 = sphi 0, %s77
      %s78 = sphi 0, %s75
      %s79 = sphi 0, %s78
      %s95 = sphi 0, %s79
      %s101 = sphi 0, %s103
      %s104 = sphi 0, %s101
      %s105 = sphi 0, %s104
      %s121 = sphi 0, %s105
      %s129 = sphi 0, %s131
      %s132 = sphi 0, %s129
      %s133 = sphi 0, %s132
      %s149 = sphi 0, %s133
      %s155 = sphi 0, %s157
      %s158 = sphi 0, %s155
      %s159 = sphi 0, %s158
      %s175 = sphi 0, %s159
      %s183 = sphi 0, %s185
      %s186 = sphi 0, %s183
      %s187 = sphi 0, %s186
      %s203 = sphi 0, %s187
    $region4: #{tpu_custom_call.1} parent=1 // loop_header_branch
      %23 = sbr.rel (%p21) target = $region8
    $region5: #{tpu_custom_call.1} parent=1 // loop_body
      %s25 = ssub.s32 %s20, 1
      %s26 = ssub.s32 %s20, 2
      %s36 = sadd.s32 1, %s29
      %p37 = scmp.ge.s32.totalorder %s36, 2
      %s38 = scalar_select %p37, 0, %s36
      %s39 = sadd.s32 1, %s28
      %s40 = scalar_select %p37, %s39, %s28
      %p41 = scmp.ge.s32.totalorder %s40, 2
      %s42 = scalar_select %p41, 0, %s40
      %s43 = sadd.s32 1, %s27
      %s44 = scalar_select %p41, %s43, %s27
      %p45 = scmp.ge.s32.totalorder %s44, 3
      %s46 = scalar_select %p45, 0, %s44
      %s47 = ssub.s32 %s27, %s46
      %p48 = scmp.eq.s32.totalorder %s47, 0
      %s50 = sadd.s32 %s49, 1
      %s51 = scalar_select %p48, %s49, %s50
      %p54 = pneg %p48
      %p55 = scmp.eq.s32.totalorder %s20, 11
      %p56 = por %p54, %p55
      %p57 = scmp.ne.s32.totalorder %s49, %s52
      %p58 = scmp.eq.s32.totalorder %s20, 0
      %p59 = por %p57, %p58
      %p60 = scmp.ne.s32.totalorder %s49, %s52
      %p61 = scmp.eq.s32.totalorder %s25, 11
      %p62 = por %p60, %p61
      %p63 = scmp.ne.s32.totalorder %s52, %s53
      %p64 = scmp.eq.s32.totalorder %s25, 0
      %p65 = por %p63, %p64
      %p66 = scmp.ne.s32.totalorder %s52, %s53
      %p67 = scmp.eq.s32.totalorder %s26, 11
      %p68 = por %p66, %p67
      %p70 = scmp.ne.s32.totalorder %s53, %s69
      %p71 = scmp.eq.s32.totalorder %s26, 0
      %p72 = por %p70, %p71
      %s73 = ssub.s32 %s29, %s38
      %p74 = scmp.eq.s32.totalorder %s73, 0
      %s76 = sadd.s32 %s75, 1
      %s77 = scalar_select %p74, %s75, %s76
      %p80 = pneg %p74
      %p81 = scmp.eq.s32.totalorder %s20, 11
      %p82 = por %p80, %p81
      %p83 = scmp.ne.s32.totalorder %s75, %s78
      %p84 = scmp.eq.s32.totalorder %s20, 0
      %p85 = por %p83, %p84
      %p86 = scmp.ne.s32.totalorder %s75, %s78
      %p87 = scmp.eq.s32.totalorder %s25, 11
      %p88 = por %p86, %p87
      %p89 = scmp.ne.s32.totalorder %s78, %s79
      %p90 = scmp.eq.s32.totalorder %s25, 0
      %p91 = por %p89, %p90
      %p92 = scmp.ne.s32.totalorder %s78, %s79
      %p93 = scmp.eq.s32.totalorder %s26, 11
      %p94 = por %p92, %p93
      %p96 = scmp.ne.s32.totalorder %s79, %s95
      %p97 = scmp.eq.s32.totalorder %s26, 0
      %p98 = por %p96, %p97
      %s99 = ssub.s32 %s29, %s38
      %p100 = scmp.eq.s32.totalorder %s99, 0
      %s102 = sadd.s32 %s101, 1
      %s103 = scalar_select %p100, %s101, %s102
      %p106 = pneg %p100
      %p107 = scmp.eq.s32.totalorder %s20, 11
      %p108 = por %p106, %p107
      %p109 = scmp.ne.s32.totalorder %s101, %s104
      %p110 = scmp.eq.s32.totalorder %s20, 0
      %p111 = por %p109, %p110
      %p112 = scmp.ne.s32.totalorder %s101, %s104
      %p113 = scmp.eq.s32.totalorder %s25, 11
      %p114 = por %p112, %p113
      %p115 = scmp.ne.s32.totalorder %s104, %s105
      %p116 = scmp.eq.s32.totalorder %s25, 0
      %p117 = por %p115, %p116
      %p118 = scmp.ne.s32.totalorder %s104, %s105
      %p119 = scmp.eq.s32.totalorder %s26, 11
      %p120 = por %p118, %p119
      %p122 = scmp.ne.s32.totalorder %s105, %s121
      %p123 = scmp.eq.s32.totalorder %s26, 0
      %p124 = por %p122, %p123
      %s125 = ssub.s32 %s29, %s38
      %s126 = ssub.s32 %s28, %s42
      %s127 = sor.u32 %s125, %s126
      %p128 = scmp.eq.s32.totalorder %s127, 0
      %s130 = sadd.s32 %s129, 1
      %s131 = scalar_select %p128, %s129, %s130
      %p134 = pneg %p128
      %p135 = scmp.eq.s32.totalorder %s20, 11
      %p136 = por %p134, %p135
      %p137 = scmp.ne.s32.totalorder %s129, %s132
      %p138 = scmp.eq.s32.totalorder %s20, 0
      %p139 = por %p137, %p138
      %p140 = scmp.ne.s32.totalorder %s129, %s132
      %p141 = scmp.eq.s32.totalorder %s25, 11
      %p142 = por %p140, %p141
      %p143 = scmp.ne.s32.totalorder %s132, %s133
      %p144 = scmp.eq.s32.totalorder %s25, 0
      %p145 = por %p143, %p144
      %p146 = scmp.ne.s32.totalorder %s132, %s133
      %p147 = scmp.eq.s32.totalorder %s26, 11
      %p148 = por %p146, %p147
      %p150 = scmp.ne.s32.totalorder %s133, %s149
      %p151 = scmp.eq.s32.totalorder %s26, 0
      %p152 = por %p150, %p151
      %s153 = ssub.s32 %s28, %s42
      %p154 = scmp.eq.s32.totalorder %s153, 0
      %s156 = sadd.s32 %s155, 1
      %s157 = scalar_select %p154, %s155, %s156
      %p160 = pneg %p154
      %p161 = scmp.eq.s32.totalorder %s20, 11
      %p162 = por %p160, %p161
      %p163 = scmp.ne.s32.totalorder %s155, %s158
      %p164 = scmp.eq.s32.totalorder %s20, 0
      %p165 = por %p163, %p164
      %p166 = scmp.ne.s32.totalorder %s155, %s158
      %p167 = scmp.eq.s32.totalorder %s25, 11
      %p168 = por %p166, %p167
      %p169 = scmp.ne.s32.totalorder %s158, %s159
      %p170 = scmp.eq.s32.totalorder %s25, 0
      %p171 = por %p169, %p170
      %p172 = scmp.ne.s32.totalorder %s158, %s159
      %p173 = scmp.eq.s32.totalorder %s26, 11
      %p174 = por %p172, %p173
      %p176 = scmp.ne.s32.totalorder %s159, %s175
      %p177 = scmp.eq.s32.totalorder %s26, 0
      %p178 = por %p176, %p177
      %s179 = ssub.s32 %s27, %s46
      %s180 = ssub.s32 %s28, %s42
      %s181 = sor.u32 %s179, %s180
      %p182 = scmp.eq.s32.totalorder %s181, 0
      %s184 = sadd.s32 %s183, 1
      %s185 = scalar_select %p182, %s183, %s184
      %p188 = pneg %p182
      %p189 = scmp.eq.s32.totalorder %s20, 11
      %p190 = por %p188, %p189
      %p191 = scmp.ne.s32.totalorder %s183, %s186
      %p192 = scmp.eq.s32.totalorder %s20, 0
      %p193 = por %p191, %p192
      %p194 = scmp.ne.s32.totalorder %s183, %s186
      %p195 = scmp.eq.s32.totalorder %s25, 11
      %p196 = por %p194, %p195
      %p197 = scmp.ne.s32.totalorder %s186, %s187
      %p198 = scmp.eq.s32.totalorder %s25, 0
      %p199 = por %p197, %p198
      %p200 = scmp.ne.s32.totalorder %s186, %s187
      %p201 = scmp.eq.s32.totalorder %s26, 11
      %p202 = por %p200, %p201
      %p204 = scmp.ne.s32.totalorder %s187, %s203
      %p205 = scmp.eq.s32.totalorder %s26, 0
      %p206 = por %p204, %p205
      %p207 = scmp.le.s32.totalorder 1, %s20
      %p208 = scmp.lt.s32.totalorder %s20, 13
      %p209 = pnand %p207, %p208
      %p210 = pneg %p209
      // Predicated region
      $region9: #{tpu_custom_call.1} parent=5 // pred_check
        _
      $region10: #{tpu_custom_call.1} parent=5 // pred_check_branch
        %212 = sbr.rel (%p209) target = $region12
      $region11: #{tpu_custom_call.1} parent=5 // pred_region
        %s213 = ssub.s32 %s20, 1
      $region12: #{tpu_custom_call.1} parent=5 // pred_fallthru
        _
      %p214 = scmp.lt.s32.totalorder %s20, 12
      // Predicated region
      $region13: #{tpu_custom_call.1} parent=5 // pred_check
        %p215 = pneg %p214
      $region14: #{tpu_custom_call.1} parent=5 // pred_check_branch
        %217 = sbr.rel (%p215) target = $region16
      $region15: #{tpu_custom_call.1} parent=5 // pred_region
        // Predicated region
        $region17: #{tpu_custom_call.1} parent=15 // pred_check
          %p218 = pneg %p59
        $region18: #{tpu_custom_call.1} parent=15 // pred_check_branch
          %220 = sbr.rel (%p218) target = $region20
        $region19: #{tpu_custom_call.1} parent=15 // pred_region
          %s221 = sand.u32 %s49, 1
          %s222 = scalar_lea.sflag [#allocation4], %s221
          %s223 = sand.u32 %s49, 1
          %s224 = smul.addr %s223, 4
          %s225 = scalar_lea.vmem [#allocation3], %s224
          %s227 = ssub.s32 64, 64
          %228 = vsyncadd %s222, %s227
          %s229 = smul.addr %s27, 64
          %s230 = scalar_lea.hbm %s0, %s229
          %s232 = sshll.u32 %s225, 4
          %s233 = int_to_ptr.vmem [resolvable:$true] %s232
          %235 = dma.hbm_to_vmem [thread:$0]  %s230, 64, %s233, %s222
        $region20: #{tpu_custom_call.1} parent=15 // pred_fallthru
          _
        // Predicated region
        $region21: #{tpu_custom_call.1} parent=15 // pred_check
          %p236 = pneg %p85
        $region22: #{tpu_custom_call.1} parent=15 // pred_check_branch
          %238 = sbr.rel (%p236) target = $region24
        $region23: #{tpu_custom_call.1} parent=15 // pred_region
          %s239 = sand.u32 %s20, 1
          %s240 = scalar_lea.sflag [#allocation7], %s239
          %s241 = sand.u32 %s75, 1
          %s242 = smul.addr %s241, 64
          %s243 = scalar_lea.vmem [#allocation6], %s242
          %s245 = ssub.s32 1024, 1024
          %246 = vsyncadd %s240, %s245
          %s247 = smul.addr %s29, 64
          %s248 = scalar_lea.hbm %s1, %s247
          %s249 = sshll.u32 %s243, 4
          %s250 = int_to_ptr.vmem [resolvable:$true] %s249
          %255 = dma.hbm_to_vmem [thread:$0]  %s248, 1024, %s250, %s240, 128, 64, 4
        $region24: #{tpu_custom_call.1} parent=15 // pred_fallthru
          _
        // Predicated region
        $region25: #{tpu_custom_call.1} parent=15 // pred_check
          %p256 = pneg %p111
        $region26: #{tpu_custom_call.1} parent=15 // pred_check_branch
          %258 = sbr.rel (%p256) target = $region28
        $region27: #{tpu_custom_call.1} parent=15 // pred_region
          %p259 = scmp.lt.s32.totalorder %s29, 1
          %s260 = scalar_select %p259, %s29, 1
          %s261 = scalar_lea.vmem %s2, %s260
        $region28: #{tpu_custom_call.1} parent=15 // pred_fallthru
          _
        // Predicated region
        $region29: #{tpu_custom_call.1} parent=15 // pred_check
          %p262 = pneg %p139
        $region30: #{tpu_custom_call.1} parent=15 // pred_check_branch
          %264 = sbr.rel (%p262) target = $region32
        $region31: #{tpu_custom_call.1} parent=15 // pred_region
          %s265 = sand.u32 %s20, 1
          %s266 = scalar_lea.sflag [#allocation7], %s265
          %s267 = sand.u32 %s129, 1
          %s268 = smul.addr %s267, 64
          %s269 = scalar_lea.vmem [#allocation8], %s268
          %s270 = smul.u32 16, %s29
          %s272 = ssub.s32 1024, 1024
          %273 = vsyncadd %s266, %s272
          %s274 = smul.addr %s270, 2
          %s275 = sadd.s32 %s28, %s274
          %s276 = smul.addr %s275, 64
          %s277 = scalar_lea.hbm %s3, %s276
          %s278 = sshll.u32 %s269, 4
          %s279 = int_to_ptr.vmem [resolvable:$true] %s278
          %284 = dma.hbm_to_vmem [thread:$0]  %s277, 1024, %s279, %s266, 128, 64, 4
        $region32: #{tpu_custom_call.1} parent=15 // pred_fallthru
          _
        // Predicated region
        $region33: #{tpu_custom_call.1} parent=15 // pred_check
          %p285 = pneg %p165
        $region34: #{tpu_custom_call.1} parent=15 // pred_check_branch
          %287 = sbr.rel (%p285) target = $region36
        $region35: #{tpu_custom_call.1} parent=15 // pred_region
          %p288 = scmp.lt.s32.totalorder %s28, 1
          %s289 = scalar_select %p288, %s28, 1
          %s290 = scalar_lea.vmem %s4, %s289
        $region36: #{tpu_custom_call.1} parent=15 // pred_fallthru
          _
      $region16: #{tpu_custom_call.1} parent=5 // pred_fallthru
        _
      %p291 = scmp.le.s32.totalorder 1, %s20
      %p292 = scmp.lt.s32.totalorder %s20, 13
      %p293 = pnand %p291, %p292
      %p294 = pneg %p293
      // Predicated region
      $region37: #{tpu_custom_call.1} parent=5 // pred_check
        _
      $region38: #{tpu_custom_call.1} parent=5 // pred_check_branch
        %296 = sbr.rel (%p293) target = $region40
      $region39: #{tpu_custom_call.1} parent=5 // pred_region
        %s297 = ssub.s32 %s20, 1
        %s298 = sand.u32 %s52, 1
        %s299 = scalar_lea.sflag [#allocation4], %s298
        %s300 = sand.u32 %s52, 1
        %s301 = smul.addr %s300, 4
        %s302 = scalar_lea.vmem [#allocation3], %s301
        // Predicated region
        $region41: #{tpu_custom_call.1} parent=39 // pred_check
          %p303 = pneg %p65
        $region42: #{tpu_custom_call.1} parent=39 // pred_check_branch
          %305 = sbr.rel (%p303) target = $region44
        $region43: #{tpu_custom_call.1} parent=39 // pred_region
          %306 = dma.done %s299, 64
        $region44: #{tpu_custom_call.1} parent=39 // pred_fallthru
          _
        %s307 = sand.u32 %s25, 1
        %s308 = scalar_lea.sflag [#allocation7], %s307
        %s309 = sand.u32 %s78, 1
        %s310 = smul.addr %s309, 64
        %s311 = scalar_lea.vmem [#allocation6], %s310
        // Predicated region
        $region45: #{tpu_custom_call.1} parent=39 // pred_check
          %p312 = pneg %p91
        $region46: #{tpu_custom_call.1} parent=39 // pred_check_branch
          %314 = sbr.rel (%p312) target = $region48
        $region47: #{tpu_custom_call.1} parent=39 // pred_region
          %315 = dma.done %s308, 1024
        $region48: #{tpu_custom_call.1} parent=39 // pred_fallthru
          _
        %s316 = sand.u32 %s25, 1
        %s317 = scalar_lea.sflag [#allocation7], %s316
        %s318 = sand.u32 %s132, 1
        %s319 = smul.addr %s318, 64
        %s320 = scalar_lea.vmem [#allocation8], %s319
        // Predicated region
        $region49: #{tpu_custom_call.1} parent=39 // pred_check
          %p321 = pneg %p145
        $region50: #{tpu_custom_call.1} parent=39 // pred_check_branch
          %323 = sbr.rel (%p321) target = $region52
        $region51: #{tpu_custom_call.1} parent=39 // pred_region
          %324 = dma.done %s317, 1024
        $region52: #{tpu_custom_call.1} parent=39 // pred_fallthru
          _
        %s325 = sand.u32 %s52, 1
        %s326 = scalar_lea.sflag [#allocation4], %s325
        %s327 = sand.u32 %s52, 1
        %s328 = smul.addr %s327, 4
        %s329 = scalar_lea.vmem [#allocation3], %s328
        %p330 = pneg %p65
        %p331 = pneg %p62
        %s332 = sand.u32 %s25, 1
        %s333 = scalar_lea.sflag [#allocation7], %s332
        %s334 = sand.u32 %s78, 1
        %s335 = smul.addr %s334, 64
        %s336 = scalar_lea.vmem [#allocation6], %s335
        %p337 = pneg %p91
        %p338 = pneg %p88
        %p339 = scmp.lt.s32.totalorder %s32, 1
        %s340 = scalar_select %p339, %s32, 1
        %s341 = scalar_lea.vmem %s2, %s340
        %p342 = pneg %p117
        %p343 = pneg %p114
        %s344 = sand.u32 %s25, 1
        %s345 = scalar_lea.sflag [#allocation7], %s344
        %s346 = sand.u32 %s132, 1
        %s347 = smul.addr %s346, 64
        %s348 = scalar_lea.vmem [#allocation8], %s347
        %p349 = pneg %p145
        %p350 = pneg %p142
        %p351 = scmp.lt.s32.totalorder %s31, 1
        %s352 = scalar_select %p351, %s31, 1
        %s353 = scalar_lea.vmem %s4, %s352
        %p354 = pneg %p171
        %p355 = pneg %p168
        %p356 = pneg %p199
        %p357 = pneg %p196
        %s358 = sand.u32 %s186, 1
        %s359 = scalar_lea.sflag [#allocation5], %s358
        %s360 = sand.u32 %s186, 1
        %s361 = smul.addr %s360, 8
        %s362 = scalar_lea.vmem [#allocation9], %s361
        %p363 = scmp.lt.s32.totalorder %s32, 1
        %s364 = scalar_select %p363, %s32, 1
        %s365 = scalar_lea.vmem %s2, %s364
        %s366 = smul.u32 16, %s32
        %p367 = scmp.lt.s32.totalorder %s31, 1
        %s368 = scalar_select %p367, %s31, 1
        %s369 = scalar_lea.vmem %s4, %s368
        %p371 = scmp.eq.s32.totalorder %s32, 0
        // Predicated region
        $region53: #{tpu_custom_call.1} parent=39 // pred_check
          %p372 = pneg %p371
        $region54: #{tpu_custom_call.1} parent=39 // pred_check_branch
          %374 = sbr.rel (%p372) target = $region56
        $region55: #{tpu_custom_call.1} parent=39 // pred_region
          %375 = vst [vmem:[#allocation2] sm:$0xff] 0.0
        $region56: #{tpu_custom_call.1} parent=39 // pred_fallthru
          _
        %v376 = vld [vmem:[%s302] sm:$0xf]
        %v377 = vld [vmem:[%s311] sm:$0xf]
        %v378 = vld [vmem:[%s311 + $0x4] sm:$0xf]
        %v379 = vld [vmem:[%s311 + $0x8] sm:$0xf]
        %v380 = vld [vmem:[%s311 + $0xc] sm:$0xf]
        %v381 = vld [vmem:[%s311 + $0x10] sm:$0xf]
        %v382 = vld [vmem:[%s311 + $0x14] sm:$0xf]
        %v383 = vld [vmem:[%s311 + $0x18] sm:$0xf]
        %v384 = vld [vmem:[%s311 + $0x1c] sm:$0xf]
        %v385 = vld [vmem:[%s311 + $0x20] sm:$0xf]
        %v386 = vld [vmem:[%s311 + $0x24] sm:$0xf]
        %v387 = vld [vmem:[%s311 + $0x28] sm:$0xf]
        %v388 = vld [vmem:[%s311 + $0x2c] sm:$0xf]
        %v389 = vld [vmem:[%s311 + $0x30] sm:$0xf]
        %v390 = vld [vmem:[%s311 + $0x34] sm:$0xf]
        %v391 = vld [vmem:[%s311 + $0x38] sm:$0xf]
        %v392 = vld [vmem:[%s311 + $0x3c] sm:$0xf]
        %v393 = vld [vmem:[%s365] sm:$0x1]
        %v395 = vlaneseq
        %v396 = vshrl.u32 %v395, 7
        %v397 = vsub.s32 0, %v396
        %v398 = vrot.slane %v393, %v397
        %v416 = vunpack.c.l.b16 %v377
        %v417 = vunpack.c.l.b16 %v378
        %v418 = vunpack.c.l.b16 %v379
        %v419 = vunpack.c.l.b16 %v380
        %v420 = vunpack.c.l.b16 %v381
        %v421 = vunpack.c.l.b16 %v382
        %v422 = vunpack.c.l.b16 %v383
        %v423 = vunpack.c.l.b16 %v384
        %v424 = vunpack.c.l.b16 %v385
        %v425 = vunpack.c.l.b16 %v386
        %v426 = vunpack.c.l.b16 %v387
        %v427 = vunpack.c.l.b16 %v388
        %v428 = vunpack.c.l.b16 %v389
        %v429 = vunpack.c.l.b16 %v390
        %v430 = vunpack.c.l.b16 %v391
        %v431 = vunpack.c.l.b16 %v392
        %v432 = vpack.c.b16 %v417, %v416
        %v433 = vpack.c.b16 %v419, %v418
        %v434 = vpack.c.b16 %v421, %v420
        %v435 = vpack.c.b16 %v423, %v422
        %v436 = vpack.c.b16 %v425, %v424
        %v437 = vpack.c.b16 %v427, %v426
        %v438 = vpack.c.b16 %v429, %v428
        %v439 = vpack.c.b16 %v431, %v430
        %448 = vmatprep.subr.bf16.mxu0 0
        %449 = vmatpush1.bf16.msra.mxu0 %v439
        %450 = vmatprep.subr.bf16.mxu0 0
        %451 = vmatpush1.bf16.msra.mxu0 %v438
        %452 = vmatprep.subr.bf16.mxu0 0
        %453 = vmatpush1.bf16.msra.mxu0 %v437
        %454 = vmatprep.subr.bf16.mxu0 0
        %455 = vmatpush1.bf16.msra.mxu0 %v436
        %456 = vmatprep.subr.bf16.mxu0 0
        %457 = vmatpush1.bf16.msra.mxu0 %v435
        %458 = vmatprep.subr.bf16.mxu0 0
        %459 = vmatpush1.bf16.msra.mxu0 %v434
        %460 = vmatprep.subr.bf16.mxu0 0
        %461 = vmatpush1.bf16.msra.mxu0 %v433
        %462 = vmatprep.subr.bf16.mxu0 0
        %463 = vmatpush1.bf16.msra.mxu0 %v432
        %464 = vmatprep.subr.bf16.mxu0 0
        %465 = vmatpush2.bf16.msra.mxu0 0
        %466 = vmatprep.subr.bf16.mxu0 0
        %467 = vmatpush2.bf16.msra.mxu0 0
        %468 = vmatprep.subr.bf16.mxu0 0
        %469 = vmatpush2.bf16.msra.mxu0 0
        %470 = vmatprep.subr.bf16.mxu0 0
        %471 = vmatpush2.bf16.msra.mxu0 0
        %472 = vmatprep.subr.bf16.mxu0 0
        %473 = vmatpush2.bf16.msra.mxu0 0
        %474 = vmatprep.subr.bf16.mxu0 0
        %475 = vmatpush2.bf16.msra.mxu0 0
        %476 = vmatprep.subr.bf16.mxu0 0
        %477 = vmatpush2.bf16.msra.mxu0 0
        %478 = vmatprep.subr.bf16.mxu0 0
        %479 = vmatpush2.bf16.msra.mxu0 0
        %480 = vmatprep.mubr.bf16.mxu0 0
        %481 = vmatmul.mubr.bf16.gmra.mxu0 %v376
        %v482 = vpop.f32.mrf.mxu0
        %v483 = vadd.f32 %v398, %v482
        %v484 = vpop.f32.mrf.mxu0
        %v485 = vpop.f32.mrf.mxu0
        %v486 = vpop.f32.mrf.mxu0
        %487 = vdwg.mxu0
        %v488 = vmax.f32 %v483, 0.0
        %v489 = vld [vmem:[#allocation2] sm:$0xff]
        %v490 = vpack.c.bf16 %v488, %v488
        %v491 = vld [vmem:[%s320] sm:$0xf]
        %v492 = vld [vmem:[%s320 + $0x4] sm:$0xf]
        %v493 = vld [vmem:[%s320 + $0x8] sm:$0xf]
        %v494 = vld [vmem:[%s320 + $0xc] sm:$0xf]
        %v495 = vld [vmem:[%s320 + $0x10] sm:$0xf]
        %v496 = vld [vmem:[%s320 + $0x14] sm:$0xf]
        %v497 = vld [vmem:[%s320 + $0x18] sm:$0xf]
        %v498 = vld [vmem:[%s320 + $0x1c] sm:$0xf]
        %v499 = vld [vmem:[%s320 + $0x20] sm:$0xf]
        %v500 = vld [vmem:[%s320 + $0x24] sm:$0xf]
        %v501 = vld [vmem:[%s320 + $0x28] sm:$0xf]
        %v502 = vld [vmem:[%s320 + $0x2c] sm:$0xf]
        %v503 = vld [vmem:[%s320 + $0x30] sm:$0xf]
        %v504 = vld [vmem:[%s320 + $0x34] sm:$0xf]
        %v505 = vld [vmem:[%s320 + $0x38] sm:$0xf]
        %v506 = vld [vmem:[%s320 + $0x3c] sm:$0xf]
        %v523 = vunpack.c.l.b16 %v491
        %v524 = vunpack.c.l.b16 %v492
        %v525 = vunpack.c.l.b16 %v493
        %v526 = vunpack.c.l.b16 %v494
        %v527 = vunpack.c.l.b16 %v495
        %v528 = vunpack.c.l.b16 %v496
        %v529 = vunpack.c.l.b16 %v497
        %v530 = vunpack.c.l.b16 %v498
        %v531 = vunpack.c.l.b16 %v499
        %v532 = vunpack.c.l.b16 %v500
        %v533 = vunpack.c.l.b16 %v501
        %v534 = vunpack.c.l.b16 %v502
        %v535 = vunpack.c.l.b16 %v503
        %v536 = vunpack.c.l.b16 %v504
        %v537 = vunpack.c.l.b16 %v505
        %v538 = vunpack.c.l.b16 %v506
        %v539 = vpack.c.b16 %v524, %v523
        %v540 = vpack.c.b16 %v526, %v525
        %v541 = vpack.c.b16 %v528, %v527
        %v542 = vpack.c.b16 %v530, %v529
        %v543 = vpack.c.b16 %v532, %v531
        %v544 = vpack.c.b16 %v534, %v533
        %v545 = vpack.c.b16 %v536, %v535
        %v546 = vpack.c.b16 %v538, %v537
        %555 = vmatprep.subr.bf16.mxu0 0
        %556 = vmatpush1.bf16.msra.mxu0 %v546
        %557 = vmatprep.subr.bf16.mxu0 0
        %558 = vmatpush1.bf16.msra.mxu0 %v545
        %559 = vmatprep.subr.bf16.mxu0 0
        %560 = vmatpush1.bf16.msra.mxu0 %v544
        %561 = vmatprep.subr.bf16.mxu0 0
        %562 = vmatpush1.bf16.msra.mxu0 %v543
        %563 = vmatprep.subr.bf16.mxu0 0
        %564 = vmatpush1.bf16.msra.mxu0 %v542
        %565 = vmatprep.subr.bf16.mxu0 0
        %566 = vmatpush1.bf16.msra.mxu0 %v541
        %567 = vmatprep.subr.bf16.mxu0 0
        %568 = vmatpush1.bf16.msra.mxu0 %v540
        %569 = vmatprep.subr.bf16.mxu0 0
        %570 = vmatpush1.bf16.msra.mxu0 %v539
        %571 = vmatprep.subr.bf16.mxu0 0
        %572 = vmatpush2.bf16.msra.mxu0 0
        %573 = vmatprep.subr.bf16.mxu0 0
        %574 = vmatpush2.bf16.msra.mxu0 0
        %575 = vmatprep.subr.bf16.mxu0 0
        %576 = vmatpush2.bf16.msra.mxu0 0
        %577 = vmatprep.subr.bf16.mxu0 0
        %578 = vmatpush2.bf16.msra.mxu0 0
        %579 = vmatprep.subr.bf16.mxu0 0
        %580 = vmatpush2.bf16.msra.mxu0 0
        %581 = vmatprep.subr.bf16.mxu0 0
        %582 = vmatpush2.bf16.msra.mxu0 0
        %583 = vmatprep.subr.bf16.mxu0 0
        %584 = vmatpush2.bf16.msra.mxu0 0
        %585 = vmatprep.subr.bf16.mxu0 0
        %586 = vmatpush2.bf16.msra.mxu0 0
        %587 = vmatprep.mubr.bf16.mxu0 0
        %588 = vmatmul.mubr.bf16.gmra.mxu0 %v490
        %v589 = vpop.f32.mrf.mxu0
        %v590 = vadd.f32 0.0, %v589
        %v591 = vpop.f32.mrf.mxu0
        %v592 = vpop.f32.mrf.mxu0
        %v593 = vpop.f32.mrf.mxu0
        %594 = vdwg.mxu0
        %v595 = vadd.f32 %v489, %v590
        %596 = vst [vmem:[#allocation2] sm:$0xff] %v595
        %p597 = scmp.eq.s32.totalorder %s32, 1
        // Predicated region
        $region57: #{tpu_custom_call.1} parent=39 // pred_check
          %p598 = pneg %p597
        $region58: #{tpu_custom_call.1} parent=39 // pred_check_branch
          %600 = sbr.rel (%p598) target = $region60
        $region59: #{tpu_custom_call.1} parent=39 // pred_region
          %v601 = vld [vmem:[#allocation2] sm:$0xff]
          %v602 = vld [vmem:[%s369] sm:$0x1]
          %v604 = vlaneseq
          %v605 = vshrl.u32 %v604, 7
          %v606 = vsub.s32 0, %v605
          %v607 = vrot.slane %v602, %v606
          %v609 = vadd.f32 %v601, %v607
          %610 = vst [vmem:[%s362] sm:$0xff] %v609
        $region60: #{tpu_custom_call.1} parent=39 // pred_fallthru
          _
        %s611 = sand.u32 %s186, 1
        %s612 = scalar_lea.sflag [#allocation5], %s611
        %s613 = sand.u32 %s186, 1
        %s614 = smul.addr %s613, 8
        %s615 = scalar_lea.vmem [#allocation9], %s614
        // Predicated region
        $region61: #{tpu_custom_call.1} parent=39 // pred_check
          %p616 = pneg %p196
        $region62: #{tpu_custom_call.1} parent=39 // pred_check_branch
          %618 = sbr.rel (%p616) target = $region64
        $region63: #{tpu_custom_call.1} parent=39 // pred_region
          %s620 = ssub.s32 128, 128
          %621 = vsyncadd %s612, %s620
          %s622 = smul.addr %s30, 2
          %s623 = sadd.s32 %s31, %s622
          %s624 = smul.addr %s623, 128
          %s625 = scalar_lea.hbm %s5, %s624
          %s627 = sshll.u32 %s615, 4
          %s628 = int_to_ptr.vmem [resolvable:$true] %s627
          %630 = dma.vmem_to_hbm [thread:$0]  %s628, 128, %s625, %s612
        $region64: #{tpu_custom_call.1} parent=39 // pred_fallthru
          _
      $region40: #{tpu_custom_call.1} parent=5 // pred_fallthru
        _
      %p631 = scmp.le.s32.totalorder 2, %s20
      // Predicated region
      $region65: #{tpu_custom_call.1} parent=5 // pred_check
        %p632 = pneg %p631
      $region66: #{tpu_custom_call.1} parent=5 // pred_check_branch
        %634 = sbr.rel (%p632) target = $region68
      $region67: #{tpu_custom_call.1} parent=5 // pred_region
        %s635 = ssub.s32 %s20, 2
        // Predicated region
        $region69: #{tpu_custom_call.1} parent=67 // pred_check
          %p636 = pneg %p202
        $region70: #{tpu_custom_call.1} parent=67 // pred_check_branch
          %638 = sbr.rel (%p636) target = $region72
        $region71: #{tpu_custom_call.1} parent=67 // pred_region
          %s639 = sand.u32 %s187, 1
          %s640 = scalar_lea.sflag [#allocation5], %s639
          %s641 = sand.u32 %s187, 1
          %s642 = smul.addr %s641, 8
          %s643 = scalar_lea.vmem [#allocation9], %s642
          %644 = dma.done %s640, 128
        $region72: #{tpu_custom_call.1} parent=67 // pred_fallthru
          _
      $region68: #{tpu_custom_call.1} parent=5 // pred_fallthru
        _
    $region6: #{tpu_custom_call.1} parent=1 // loop_footer
      %s24 = sadd.s32 1, %s20
    $region7: #{tpu_custom_call.1} parent=1 // loop_footer_branch
      %19 = sbr.rel target = $region3
    $region8: #{tpu_custom_call.1} parent=1 // loop_exit
      _
    %645 = vsyncpa [#allocation4], 1
    %s646 = scalar_lea.sflag [#allocation4], 1
    %647 = vsyncpa %s646, 1
    %648 = vsyncpa [#allocation7], 1
    %s649 = scalar_lea.sflag [#allocation7], 1
    %650 = vsyncpa %s649, 1
    %651 = vsyncpa [#allocation5], 1
    %s652 = scalar_lea.sflag [#allocation5], 1
    %653 = vsyncpa %s652, 1

</llo_original>
